<compile_context>
chip_gen: v5e
topology: v5e:2x2
jax: 0.10.0
libtpu: 0.0.40
codegen_flags: <defaults>
</compile_context>

<pallas_src>
import functools
import math

import jax
import jax.numpy as jnp
from jax.experimental import pallas as pl
from jax.experimental.pallas import tpu as pltpu


def _cdiv(a, b):
    return -(-a // b)


def _round_up(a, b):
    return _cdiv(a, b) * b


def _chip_profile():
    """Generation-aware block-size / VMEM / core-count defaults."""
    kind = ""
    try:
        kind = jax.devices()[0].device_kind.lower()
    except Exception:
        pass
    if "v7" in kind or "7x" in kind:
        prof = dict(block_bytes=4 << 20, vmem_cap=48 << 20, n_cores=2)
    elif "v6" in kind:
        prof = dict(block_bytes=6 << 20, vmem_cap=96 << 20, n_cores=1)
    elif "v5" in kind:
        prof = dict(block_bytes=8 << 20, vmem_cap=96 << 20, n_cores=1)
    else:
        prof = dict(block_bytes=4 << 20, vmem_cap=48 << 20, n_cores=1)
    try:  # refine the VMEM cap from the actual chip if the query is available
        info = pltpu.get_tpu_info()
        cap = getattr(info, "vmem_capacity_bytes", None)
        if cap:
            prof["vmem_cap"] = min(prof["vmem_cap"], int(cap) * 3 // 4)
    except Exception:
        pass
    return prof


def _label_smoothing_kernel(x_ref, t_ref, o_ref, acc_ref, *,
                            padding_idx, confidence, fill, acc_rows):
    step = pl.program_id(1)

    @pl.when(step == 0)
    def _():
        acc_ref[...] = jnp.zeros_like(acc_ref)

    x = x_ref[...]                      # (tm, V) log-probs, kept in native dtype
    t = t_ref[...]                      # (tm, 1) int32 targets
    tm, V = x.shape

    # broadcasted_iota along lanes lowers to per-vreg lane iota (no VMEM temp).
    col = jax.lax.broadcasted_iota(jnp.int32, (tm, V), 1)
    is_tgt = col == t

    # keep == positions with nonzero target-distribution mass.  Literal 0 is
    # selected (not multiplied) elsewhere, so -inf log-probs never give NaN.
    keep = (t != padding_idx) & (col != padding_idx)
    if confidence == 0.0:               # smoothing == 1: target column has 0 mass
        keep = keep & jnp.logical_not(is_tgt)
    if fill == 0.0:                     # smoothing == 0: only target column has mass
        keep = keep & is_tgt

    neg_conf = jnp.asarray(-confidence, x.dtype)
    neg_fill = jnp.asarray(-fill, x.dtype)
    coeff = jnp.where(is_tgt, neg_conf, neg_fill)
    contrib = jnp.where(keep, coeff * x, jnp.asarray(0, x.dtype))

    # Sublane-aligned vreg adds into the (acc_rows, V) f32 accumulator; the single
    # cross-lane/sublane reduction happens once, in the final pl.when.
    acc_ref[...] += contrib.reshape(tm // acc_rows, acc_rows, V).sum(
        axis=0, dtype=jnp.float32)

    @pl.when(step == pl.num_programs(1) - 1)
    def _():
        o_ref[0] = jnp.sum(acc_ref[...], keepdims=True)


def label_smoothing_loss(x, target, *, size, padding_idx, smoothing,
                         block_bytes=None):
    """Scalar KLDivLoss(size_average=False) of LabelSmoothing.forward."""
    N, V = x.shape
    assert V == size
    assert size > 2, "LabelSmoothing requires size > 2 (fill = smoothing/(size-2))"

    confidence = 1.0 - smoothing
    fill = smoothing / (size - 2)
    # Constant (data-independent) part of the per-active-row loss, applied in the
    # wrapper; 0*log(0) := 0 convention of KLDivLoss.
    log_fill = math.log(fill) if fill > 0.0 else 0.0
    log_conf = math.log(confidence) if confidence > 0.0 else 0.0
    const_term = (size - 2) * fill * log_fill + confidence * log_conf

    prof = _chip_profile()
    if block_bytes is None:
        block_bytes = prof["block_bytes"]
    vmem_cap = prof["vmem_cap"]

    itemsize = jnp.dtype(x.dtype).itemsize
    sub = {4: 8, 2: 16, 1: 32}.get(itemsize, 8)   # sublane tile per dtype
    V_lanes = _round_up(V, 128)                   # VMEM lane padding of the last dim
    # TODO(synk): for tiny V (< 128, e.g. the demo's V=32) folding 128//V rows per
    # VMEM row would avoid the 4x lane padding; accepted here since production
    # label smoothing uses a large vocabulary.

    # Row tile: bounded by (a) the HBM block-size target, (b) the VMEM budget
    # (double-buffered x/target blocks + ~3 full-tile f32 temporaries), (c) 16384.
    per_row_hbm = V * itemsize + 4
    per_row_vmem = 2 * (V_lanes * itemsize + 512) + 3 * V_lanes * 4
    tm_cap = min(block_bytes // per_row_hbm,
                 max(1, (vmem_cap - (4 << 20)) // per_row_vmem),
                 16384)
    tm_cap = max(sub, (tm_cap // sub) * sub)

    n_blocks = _cdiv(N, tm_cap)
    # One partial per TensorCore only on multi-TC chips (v7x); single-TC chips use
    # n_split=1 to avoid padded-block overhead.
    n_split = 2 if (prof["n_cores"] >= 2 and n_blocks >= 2) else 1
    n_blocks = _round_up(n_blocks, n_split)
    tm = _round_up(_cdiv(N, n_blocks), sub)
    n_pad = tm * n_blocks
    steps = n_blocks // n_split

    t2 = target.astype(jnp.int32).reshape(N, 1)
    if n_pad != N:
        # Padded rows get target == padding_idx and therefore contribute exactly 0.
        x = jnp.pad(x, ((0, n_pad - N), (0, 0)))
        t2 = jnp.pad(t2, ((0, n_pad - N), (0, 0)), constant_values=padding_idx)

    vmem_limit = int(min(max(tm * per_row_vmem + (2 << 20), 24 << 20), vmem_cap))

    kernel = functools.partial(
        _label_smoothing_kernel,
        padding_idx=padding_idx,
        confidence=confidence,
        fill=fill,
        acc_rows=sub,
    )

    out = pl.pallas_call(
        kernel,
        out_shape=jax.ShapeDtypeStruct((n_split, 1, 1), jnp.float32),
        grid_spec=pltpu.PrefetchScalarGridSpec(
            num_scalar_prefetch=0,
            grid=(n_split, steps),
            in_specs=[
                pl.BlockSpec((tm, V), lambda c, i: (c * steps + i, 0)),
                pl.BlockSpec((tm, 1), lambda c, i: (c * steps + i, 0)),
            ],
            out_specs=pl.BlockSpec((1, 1, 1), lambda c, i: (c, 0, 0)),
            scratch_shapes=[pltpu.VMEM((sub, V), jnp.float32)],
        ),
        compiler_params=pltpu.CompilerParams(
            dimension_semantics=("parallel", "arbitrary"),
            vmem_limit_bytes=vmem_limit),
    )(x, t2)

    n_active = jnp.sum((target != padding_idx).astype(jnp.float32))
    return jnp.sum(out) + jnp.float32(const_term) * n_active


def _reference(x, target, *, size, padding_idx, smoothing):
    # Pure-JAX reference mirroring the PyTorch module (elementwise form).
    confidence = 1.0 - smoothing
    fill = smoothing / (size - 2)
    N, V = x.shape
    col = jnp.arange(V)[None, :]
    t = target.reshape(N, 1)
    td = jnp.full((N, V), fill, jnp.float32)
    td = jnp.where(col == t, confidence, td)
    td = jnp.where(col == padding_idx, 0.0, td)
    td = jnp.where(t == padding_idx, 0.0, td)
    safe = jnp.where(td > 0, td, 1.0)
    return jnp.sum(jnp.where(td > 0, td * (jnp.log(safe) - x), 0.0))


if __name__ == "__main__":
    SIZE = 32          # vocab size (x.size(1))
    PADDING_IDX = 0
    SMOOTHING = 0.1
    N = 8              # number of tokens / rows

    key = jax.random.PRNGKey(0)
    kx, kt = jax.random.split(key)

    # x: log-probabilities over the vocab, as fed to KLDivLoss in the module
    logits = jax.random.normal(kx, (N, SIZE), dtype=jnp.float32)
    x = jax.nn.log_softmax(logits, axis=-1)

    # targets: include at least one padding token to exercise the row-masking path
    target = jax.random.randint(kt, (N,), minval=1, maxval=SIZE, dtype=jnp.int32)
    target = target.at[3].set(PADDING_IDX)

    loss = label_smoothing_loss(
        x, target, size=SIZE, padding_idx=PADDING_IDX, smoothing=SMOOTHING)
    loss = jax.block_until_ready(loss)

    ref = _reference(x, target, size=SIZE, padding_idx=PADDING_IDX,
                     smoothing=SMOOTHING)
    assert jnp.allclose(loss, ref, rtol=1e-5, atol=1e-4), (loss, ref)

    print("KERNEL_OK")
</pallas_src>

<mosaic_0001>
module attributes {stable_mosaic.version = 11 : i64} {
  func.func @_label_smoothing_kernel(%arg0: i32, %arg1: i32, %arg2: memref<8x32xf32, #tpu.memory_space<vmem>>, %arg3: memref<8x1xi32, #tpu.memory_space<vmem>>, %arg4: memref<1x1x1xf32, #tpu.memory_space<vmem>>, %arg5: memref<8x32xf32, #tpu.memory_space<vmem>>) attributes {dimension_semantics = [#tpu.dimension_semantics<parallel>, #tpu.dimension_semantics<arbitrary>], iteration_bounds = array<i64: 1, 1>, scalar_prefetch = 0 : i64, scratch_operands = 1 : i64, tpu.core_type = #tpu.core_type<tc>, window_params = [{transform_indices = @transform_0, window_bounds = array<i64: 8, 32>}, {transform_indices = @transform_1, window_bounds = array<i64: 8, 1>}, {transform_indices = @transform_2, window_bounds = array<i64: 1, 1, 1>}]} {
    %c0_i32 = arith.constant 0 : i32
    %0 = arith.cmpi eq, %arg1, %c0_i32 : i32
    %1 = arith.extui %0 : i1 to i32
    %c0_i32_0 = arith.constant 0 : i32
    %2 = arith.cmpi ne, %1, %c0_i32_0 : i32
    scf.if %2 {
      %cst_15 = arith.constant 0.000000e+00 : f32
      %28 = vector.broadcast %cst_15 : f32 to vector<8x32xf32>
      %c0_16 = arith.constant 0 : index
      %c0_17 = arith.constant 0 : index
      %29 = vector.load %arg5[%c0_16, %c0_17] : memref<8x32xf32, #tpu.memory_space<vmem>>, vector<8x32xf32>
      tpu.vector_store %arg5[%c0_16, %c0_17], %28 {strides = array<i32>} : memref<8x32xf32, #tpu.memory_space<vmem>>, vector<8x32xf32>,
    } else {
    }
    %c0 = arith.constant 0 : index
    %c0_1 = arith.constant 0 : index
    %3 = vector.load %arg2[%c0, %c0_1] : memref<8x32xf32, #tpu.memory_space<vmem>>, vector<8x32xf32>
    %c0_2 = arith.constant 0 : index
    %c0_3 = arith.constant 0 : index
    %4 = vector.load %arg3[%c0_2, %c0_3] : memref<8x1xi32, #tpu.memory_space<vmem>>, vector<8x1xi32>
    %5 = tpu.iota {dimensions = array<i32: 1>} : vector<8x32xi32>
    %6 = vector.broadcast %4 : vector<8x1xi32> to vector<8x32xi32>
    %7 = arith.cmpi eq, %5, %6 : vector<8x32xi32>
    %c0_i32_4 = arith.constant 0 : i32
    %8 = vector.broadcast %c0_i32_4 : i32 to vector<8x1xi32>
    %9 = arith.cmpi ne, %4, %8 : vector<8x1xi32>
    %c0_i32_5 = arith.constant 0 : i32
    %10 = vector.broadcast %c0_i32_5 : i32 to vector<8x32xi32>
    %11 = arith.cmpi ne, %5, %10 : vector<8x32xi32>
    %12 = vector.broadcast %9 : vector<8x1xi1> to vector<8x32xi1>
    %13 = arith.andi %12, %11 : vector<8x32xi1>
    %cst = arith.constant -0.899999976 : f32
    %cst_6 = arith.constant -0.00333333341 : f32
    %14 = vector.broadcast %cst : f32 to vector<8x32xf32>
    %15 = vector.broadcast %cst_6 : f32 to vector<8x32xf32>
    %16 = arith.select %7, %14, %15 : vector<8x32xi1>, vector<8x32xf32>
    %17 = arith.mulf %16, %3 : vector<8x32xf32>
    %cst_7 = arith.constant 0.000000e+00 : f32
    %18 = vector.broadcast %cst_7 : f32 to vector<8x32xf32>
    %19 = arith.select %13, %17, %18 : vector<8x32xi1>, vector<8x32xf32>
    %c0_8 = arith.constant 0 : index
    %c0_9 = arith.constant 0 : index
    %20 = vector.load %arg5[%c0_8, %c0_9] : memref<8x32xf32, #tpu.memory_space<vmem>>, vector<8x32xf32>
    %21 = vector.shape_cast %19 : vector<8x32xf32> to vector<1x8x32xf32>
    %cst_10 = arith.constant dense<0.000000e+00> : vector<8x32xf32>
    %22 = vector.multi_reduction <add>, %21, %cst_10 [0] : vector<1x8x32xf32> to vector<8x32xf32>
    %23 = arith.addf %20, %22 : vector<8x32xf32>
    %c0_11 = arith.constant 0 : index
    %c0_12 = arith.constant 0 : index
    %24 = vector.load %arg5[%c0_11, %c0_12] : memref<8x32xf32, #tpu.memory_space<vmem>>, vector<8x32xf32>
    tpu.vector_store %arg5[%c0_11, %c0_12], %23 {strides = array<i32>} : memref<8x32xf32, #tpu.memory_space<vmem>>, vector<8x32xf32>,
    %c0_i32_13 = arith.constant 0 : i32
    %25 = arith.cmpi eq, %arg1, %c0_i32_13 : i32
    %26 = arith.extui %25 : i1 to i32
    %c0_i32_14 = arith.constant 0 : i32
    %27 = arith.cmpi ne, %26, %c0_i32_14 : i32
    scf.if %27 {
      %c0_15 = arith.constant 0 : index
      %c0_16 = arith.constant 0 : index
      %28 = vector.load %arg5[%c0_15, %c0_16] : memref<8x32xf32, #tpu.memory_space<vmem>>, vector<8x32xf32>
      %29 = vector.shape_cast %28 : vector<8x32xf32> to vector<1x8x32xf32>
      %cst_17 = arith.constant dense<0.000000e+00> : vector<1xf32>
      %30 = vector.multi_reduction <add>, %29, %cst_17 [1, 2] : vector<1x8x32xf32> to vector<1xf32>
      %31 = vector.shape_cast %30 : vector<1xf32> to vector<1x1x1xf32>
      %32 = vector.extract %31[0, 0, 0] : f32 from vector<1x1x1xf32>
      %33 = vector.broadcast %32 : f32 to vector<1x1xf32>
      %c0_18 = arith.constant 0 : index
      %c0_19 = arith.constant 0 : index
      %c0_20 = arith.constant 0 : index
      %34 = vector.load %arg4[%c0_18, %c0_19, %c0_20] : memref<1x1x1xf32, #tpu.memory_space<vmem>>, vector<1x1x1xf32>
      %35 = vector.shape_cast %34 : vector<1x1x1xf32> to vector<1x1xf32>
      %36 = vector.shape_cast %33 : vector<1x1xf32> to vector<1x1x1xf32>
      tpu.vector_store %arg4[%c0_18, %c0_19, %c0_20], %36 {strides = array<i32>} : memref<1x1x1xf32, #tpu.memory_space<vmem>>, vector<1x1x1xf32>,
    } else {
    }
    return
  }
  func.func @transform_0(%arg0: i32, %arg1: i32) -> (i32, i32) {
    %c1_i32 = arith.constant 1 : i32
    %0 = arith.muli %arg0, %c1_i32 : i32
    %1 = arith.addi %0, %arg1 : i32
    %c0_i32 = arith.constant 0 : i32
    %c0_i32_0 = arith.constant 0 : i32
    return %1, %c0_i32 : i32, i32
  }
  func.func @transform_1(%arg0: i32, %arg1: i32) -> (i32, i32) {
    %c1_i32 = arith.constant 1 : i32
    %0 = arith.muli %arg0, %c1_i32 : i32
    %1 = arith.addi %0, %arg1 : i32
    %c0_i32 = arith.constant 0 : i32
    %c0_i32_0 = arith.constant 0 : i32
    return %1, %c0_i32 : i32, i32
  }
  func.func @transform_2(%arg0: i32, %arg1: i32) -> (i32, i32, i32) {
    %c0_i32 = arith.constant 0 : i32
    %c0_i32_0 = arith.constant 0 : i32
    %c0_i32_1 = arith.constant 0 : i32
    return %arg0, %c0_i32, %c0_i32_0 : i32, i32, i32
  }
}

</mosaic_0001>

<llo_original>
// kernel: tpu_custom_call.1
$region0: #{tpu_custom_call.1}
  #allocation0 [shape = 'u32[]', space=smem, size = 0x4, offset = 0x4, fixed_abs, tag = 'smem constant byte address 0x4 - core index']
  #allocation1 [shape = 'u32[72,128]{1,0:T(1,128)}', space=vmem, size = 0x9000, scoped, tag = 'internal scratch']
  #allocation2 [shape = 'f32[8,32]{1,0:T(8,128)}', space=vmem, size = 0x1000, scoped, tag = 'scratch operand']
  %s0 = inlined_call_operand.vmem [shape: f32[8,32], index: 0, kind: input, shape index: {}]
  %s1 = inlined_call_operand.vmem [shape: s32[8,1], index: 1, kind: input, shape index: {}]
  %s2 = inlined_call_operand.hbm [shape: f32[1,1,1], index: 2, kind: output, shape index: {}]
  %s3 = sld [smem:[#allocation0]]
  $region26: #{tpu_custom_call.1} parent=0
    _
  %s5 = ssub.s32 1, %s3
  %s6 = scalar_select 0, %s5, %s3
  $region1: #{tpu_custom_call.1} parent=0
    #allocation3 [shape = 'u8[512]{0}', space=vmem, size = 0x400, scoped, tag = 'output window, operand 0, single buffered']
    #allocation4 [shape = 's32[1]{0}', space=sflag, size = 0x4, scoped, tag = 'scoped memory for tpu_custom_call.1']
    %7 = vsyncpa [#allocation4], 0
    // Predicated region
    $region2: #{tpu_custom_call.1} parent=1 // pred_check
      _
    $region3: #{tpu_custom_call.1} parent=1 // pred_check_branch
      %9 = sbr.rel (0) target = $region5
    $region4: #{tpu_custom_call.1} parent=1 // pred_region
      %s10 = sadd.s32 0, 0
      %p11 = scmp.lt.s32.totalorder %s10, 0
      %s12 = scalar_select %p11, %s10, 0
      %s13 = smul.addr %s12, 8
      %s14 = scalar_lea.vmem %s0, %s13
      %s15 = sadd.s32 0, 0
    $region5: #{tpu_custom_call.1} parent=1 // pred_fallthru
      _
    // Predicated region
    $region6: #{tpu_custom_call.1} parent=1 // pred_check
      _
    $region7: #{tpu_custom_call.1} parent=1 // pred_check_branch
      %17 = sbr.rel (0) target = $region9
    $region8: #{tpu_custom_call.1} parent=1 // pred_region
      %s18 = sadd.s32 0, 0
      %p19 = scmp.lt.s32.totalorder %s18, 0
      %s20 = scalar_select %p19, %s18, 0
      %s21 = smul.addr %s20, 8
      %s22 = scalar_lea.vmem %s1, %s21
      %s23 = sadd.s32 0, 0
    $region9: #{tpu_custom_call.1} parent=1 // pred_fallthru
      _
    %s24 = sadd.s32 0, 0
    %p25 = scmp.lt.s32.totalorder %s24, 0
    %s26 = scalar_select %p25, %s24, 0
    %s27 = smul.addr %s26, 8
    %s28 = scalar_lea.vmem %s0, %s27
    %s29 = sadd.s32 0, 0
    %p30 = scmp.lt.s32.totalorder %s29, 0
    %s31 = scalar_select %p30, %s29, 0
    %s32 = smul.addr %s31, 8
    %s33 = scalar_lea.vmem %s1, %s32
    %s34 = sadd.s32 0, 0
    %p35 = scmp.lt.s32.totalorder %s34, 0
    %s36 = scalar_select %p35, %s34, 0
    %s37 = smul.addr %s36, 8
    %s38 = scalar_lea.vmem %s0, %s37
    %s39 = sadd.s32 0, 0
    %s40 = sadd.s32 0, 0
    %p41 = scmp.lt.s32.totalorder %s40, 0
    %s42 = scalar_select %p41, %s40, 0
    %s43 = smul.addr %s42, 8
    %s44 = scalar_lea.vmem %s1, %s43
    %s45 = sadd.s32 0, 0
    %p46 = scmp.eq.s32.totalorder 0, 0
    // Predicated region
    $region10: #{tpu_custom_call.1} parent=1 // pred_check
      %p47 = pneg %p46
    $region11: #{tpu_custom_call.1} parent=1 // pred_check_branch
      %49 = sbr.rel (%p47) target = $region13
    $region12: #{tpu_custom_call.1} parent=1 // pred_region
      %vm50 = vcmask 261120
      %51 = vst.msk [vmem:[#allocation2] sm:$0xff] %vm50, 0.0
    $region13: #{tpu_custom_call.1} parent=1 // pred_fallthru
      _
    %v52 = vld [vmem:[%s38] sm:$0xff]
    %v53 = vld [vmem:[%s44] sm:$0xff]
    %v54 = vlaneseq
    %v55 = vand.u32 %v54, 127
    %56 = vset.pattern.permute.xlu0 0
    %57 = vperm.xlu0 %56, %v53
    %v58 = vpop.permute.xlu0 %57
    %vm59 = vcmp.eq.s32.totalorder %v55, %v58
    %vm60 = vcmp.ne.s32.totalorder %v53, 0
    %vm61 = vcmp.ne.s32.totalorder %v55, 0
    %v62 = vsel %vm60, 1, 0
    %63 = vset.pattern.permute.xlu0 0
    %64 = vperm.xlu0 %63, %v62
    %v65 = vpop.permute.xlu0 %64
    %vm66 = vcmp.eq.s32.totalorder %v65, 1
    %vm67 = vmand %vm66, %vm61
    %v68 = vsel %vm59, -0.9, -0.0033333334
    %v69 = vmul.f32 %v68, %v52
    %v70 = vsel %vm67, %v69, 0.0
    %v71 = vld [vmem:[#allocation2] sm:$0xff]
    %v72 = vadd.f32 %v70, 0.0
    %v73 = vadd.f32 %v71, %v72
    %vm74 = vcmask 261120
    %75 = vst.msk [vmem:[#allocation2] sm:$0xff] %vm74, %v73
    // Predicated region
    $region14: #{tpu_custom_call.1} parent=1 // pred_check
      %p76 = pneg %p46
    $region15: #{tpu_custom_call.1} parent=1 // pred_check_branch
      %78 = sbr.rel (%p76) target = $region17
    $region16: #{tpu_custom_call.1} parent=1 // pred_region
      %v79 = vld [vmem:[#allocation2] sm:$0xff]
      %v80 = vsel %vm74, %v79, 0.0
      %81 = vadd.xlane.f32.xlu0 %v80
      %v82 = vpop.xlane.xlu0 %81
      %v83 = vrot.slane %v82, 4
      %v84 = vadd.f32 %v82, %v83
      %v85 = vrot.slane %v84, 2
      %v86 = vadd.f32 %v84, %v85
      %v87 = vrot.slane %v86, 1
      %v88 = vadd.f32 %v86, %v87
      %s89 = vtos %v88
      %v90 = vstv %s89
      %vm91 = vcmask 0
      %92 = vst.msk [vmem:[#allocation3] sm:$0x1] %vm91, %v90
    $region17: #{tpu_custom_call.1} parent=1 // pred_fallthru
      _
    // Predicated region
    $region18: #{tpu_custom_call.1} parent=1 // pred_check
      _
    $region19: #{tpu_custom_call.1} parent=1 // pred_check_branch
      %94 = sbr.rel (0) target = $region21
    $region20: #{tpu_custom_call.1} parent=1 // pred_region
      %96 = vsyncadd [#allocation4], 0
      %s98 = sshll.u32 [#allocation3], 4
      %s99 = int_to_ptr.vmem [resolvable:$true] %s98
      %s100 = sshll.u32 %s2, 4
      %s101 = int_to_ptr.hbm [resolvable:$true] %s100
      %103 = dma.vmem_to_hbm [thread:$0]  %s99, 16, %s101, [#allocation4]
    $region21: #{tpu_custom_call.1} parent=1 // pred_fallthru
      _
    // Predicated region
    $region22: #{tpu_custom_call.1} parent=1 // pred_check
      _
    $region23: #{tpu_custom_call.1} parent=1 // pred_check_branch
      %105 = sbr.rel (0) target = $region25
    $region24: #{tpu_custom_call.1} parent=1 // pred_region
      %107 = dma.done [#allocation4], 16
    $region25: #{tpu_custom_call.1} parent=1 // pred_fallthru
      _
    %108 = vsyncpa [#allocation4], 1

</llo_original>
